<compile_context>
chip_gen: v7x
topology: tpu7x:2x2x1
jax: 0.10.0
libtpu: 0.0.40
codegen_flags: <defaults>
</compile_context>

<pallas_src>
import functools

import jax
import jax.numpy as jnp
from jax.experimental import pallas as pl
from jax.experimental.pallas import tpu as pltpu


def _relu_kernel(x_ref, o_ref):
    # Weak-typed 0.0 preserves dtype; NaN propagation matches torch.nn.ReLU.
    o_ref[...] = jnp.maximum(x_ref[...], 0.0)


def _relu_2d(x2d: jax.Array) -> jax.Array:
    """ReLU on a lane-dense 2D slab, single whole-array block resident in VMEM."""
    n_elems = x2d.shape[0] * x2d.shape[1]
    itemsize = jnp.dtype(x2d.dtype).itemsize
    return pl.pallas_call(
        _relu_kernel,
        out_shape=jax.ShapeDtypeStruct(x2d.shape, x2d.dtype),
        in_specs=[pl.BlockSpec(memory_space=pltpu.MemorySpace.VMEM)],
        out_specs=pl.BlockSpec(memory_space=pltpu.MemorySpace.VMEM),
        input_output_aliases={0: 0},  # in-place: honored because caller donates x
        cost_estimate=pl.CostEstimate(
            flops=n_elems,
            transcendentals=0,
            bytes_accessed=2 * n_elems * itemsize,
        ),
    )(x2d)


@functools.partial(jax.jit, donate_argnums=0)
def relu_pallas(x_nchw: jax.Array) -> jax.Array:
    """ReLU over an NCHW tensor using a Pallas TPU kernel (true in-place)."""
    n, c, h, w = x_nchw.shape
    total = n * c * h * w

    if total % 128 == 0:
        # Contiguous view of the NCHW buffer as (rows, 128): 128-lane dense,
        # unmasked vector stores. For [1,128,7,7]: 6272 -> [49, 128].
        y2d = _relu_2d(x_nchw.reshape(total // 128, 128))
        return y2d.reshape(n, c, h, w)

    # Fallback for sizes not divisible by 128: pad the flat view up to the next
    # multiple of 128 so the kernel still sees a lane-dense (rows, 128) slab,
    # then slice the valid prefix back out. (Not taken for the module's shape.)
    padded = pl.cdiv(total, 128) * 128
    x_flat = jnp.pad(x_nchw.reshape(total), (0, padded - total))
    y2d = _relu_2d(x_flat.reshape(padded // 128, 128))
    return y2d.reshape(padded)[:total].reshape(n, c, h, w)


if __name__ == "__main__":
    key = jax.random.PRNGKey(0)
    # Shape implied by the module's forward: [1, 128, 7, 7] (already small: 25 KiB).
    x = jax.random.normal(key, (1, 128, 7, 7), dtype=jnp.float32)
    x_shape, x_dtype = x.shape, x.dtype

    # Reference must be computed BEFORE the call: x's buffer is donated below.
    y_ref = jnp.maximum(x, 0.0)
    jax.block_until_ready(y_ref)

    y = relu_pallas(x)
    jax.block_until_ready(y)

    assert y.shape == x_shape and y.dtype == x_dtype
    assert jnp.allclose(y, y_ref), "mismatch vs reference ReLU"

    print("KERNEL_OK")
</pallas_src>

<mosaic_0001>
module attributes {stable_mosaic.version = 11 : i64} {
  func.func @_relu_kernel(%arg0: memref<49x128xf32, #tpu.memory_space<vmem>>, %arg1: memref<49x128xf32, #tpu.memory_space<vmem>>) attributes {dimension_semantics = [], scalar_prefetch = 0 : i64, scratch_operands = 0 : i64, tpu.core_type = #tpu.core_type<tc>} {
    %c0 = arith.constant 0 : index
    %c0_0 = arith.constant 0 : index
    %0 = vector.load %arg0[%c0, %c0_0] : memref<49x128xf32, #tpu.memory_space<vmem>>, vector<49x128xf32>
    %cst = arith.constant 0.000000e+00 : f32
    %1 = vector.broadcast %cst : f32 to vector<49x128xf32>
    %2 = arith.maximumf %0, %1 : vector<49x128xf32>
    %c0_1 = arith.constant 0 : index
    %c0_2 = arith.constant 0 : index
    %3 = vector.load %arg1[%c0_1, %c0_2] : memref<49x128xf32, #tpu.memory_space<vmem>>, vector<49x128xf32>
    tpu.vector_store %arg1[%c0_1, %c0_2], %2 {strides = array<i32>} : memref<49x128xf32, #tpu.memory_space<vmem>>, vector<49x128xf32>,
    return
  }
}

</mosaic_0001>

<llo_original>
// kernel: relu_pallas.1
$region0: #{relu_pallas.1}
  #allocation0 [shape = 'u32[]', space=smem, size = 0x4, offset = 0x4, fixed_abs, tag = 'smem constant byte address 0x4 - core index']
  #allocation1 [shape = 'u32[144,128]{1,0:T(1,128)}', space=vmem, size = 0x12000, scoped, tag = 'internal scratch']
  %s0 = inlined_call_operand.vmem [shape: f32[49,128], index: 0, kind: input, shape index: {}, may-alias: {0,1}]
  %s1 = inlined_call_operand.vmem [shape: f32[49,128], index: 1, kind: output, shape index: {}, may-alias: {0,1}]
  %s2 = sld [smem:[#allocation0]]
  $region14: #{relu_pallas.1} parent=0
    _
  %s4 = ssub.s32 1, %s2
  %s5 = scalar_select 0, %s4, %s2
  // Predicated region
  $region2: #{relu_pallas.1} parent=0 // pred_check
    _
  $region3: #{relu_pallas.1} parent=0 // pred_check_branch
    %7 = sbr.rel (0) target = $region5
  $region4: #{relu_pallas.1} parent=0 // pred_region
    _
  $region5: #{relu_pallas.1} parent=0 // pred_fallthru
    _
  %v8 = vld [vmem:[%s0] sm:$0xff]
  %v9 = vld [vmem:[%s0 + $0x8] sm:$0xff]
  %v10 = vld [vmem:[%s0 + $0x10] sm:$0xff]
  %v11 = vld [vmem:[%s0 + $0x18] sm:$0xff]
  %v12 = vld [vmem:[%s0 + $0x20] sm:$0xff]
  %v13 = vld [vmem:[%s0 + $0x28] sm:$0xff]
  %v14 = vld [vmem:[%s0 + $0x30] sm:$0x1]
  %v15 = vmax.f32 %v8, 0.0
  %v16 = vmax.f32 %v9, 0.0
  %v17 = vmax.f32 %v10, 0.0
  %v18 = vmax.f32 %v11, 0.0
  %v19 = vmax.f32 %v12, 0.0
  %v20 = vmax.f32 %v13, 0.0
  %v21 = vmax.f32 %v14, 0.0
  %22 = vst [vmem:[%s1] sm:$0xff] %v15
  %23 = vst [vmem:[%s1 + $0x8] sm:$0xff] %v16
  %24 = vst [vmem:[%s1 + $0x10] sm:$0xff] %v17
  %25 = vst [vmem:[%s1 + $0x18] sm:$0xff] %v18
  %26 = vst [vmem:[%s1 + $0x20] sm:$0xff] %v19
  %27 = vst [vmem:[%s1 + $0x28] sm:$0xff] %v20
  %28 = vst [vmem:[%s1 + $0x30] sm:$0x1] %v21
  // Predicated region
  $region6: #{relu_pallas.1} parent=0 // pred_check
    _
  $region7: #{relu_pallas.1} parent=0 // pred_check_branch
    %30 = sbr.rel (0) target = $region9
  $region8: #{relu_pallas.1} parent=0 // pred_region
    _
  $region9: #{relu_pallas.1} parent=0 // pred_fallthru
    _
  // Predicated region
  $region10: #{relu_pallas.1} parent=0 // pred_check
    _
  $region11: #{relu_pallas.1} parent=0 // pred_check_branch
    %32 = sbr.rel (0) target = $region13
  $region12: #{relu_pallas.1} parent=0 // pred_region
    _
  $region13: #{relu_pallas.1} parent=0 // pred_fallthru
    _

</llo_original>
